<compile_context>
chip_gen: v7x
topology: tpu7x:2x2x1
jax: 0.10.0
libtpu: 0.0.40
codegen_flags: <defaults>
</compile_context>

<pallas_src>
import functools
import math

import jax
import jax.numpy as jnp
from jax.experimental import pallas as pl
from jax.experimental.pallas import tpu as pltpu


# -----------------------------------------------------------------------------
# Tiling helpers
# -----------------------------------------------------------------------------
_VMEM_LIMIT_BYTES = 32 << 20          # safe scoped-VMEM limit on v5e/v6e/v7x
_MAX_BLOCK_BYTES = 4 << 20            # ~4 MiB per (tb, C) block -> near HBM roofline


def _round_up(v, m):
    return (v + m - 1) // m * m


def _choose_row_tile(n_rows, n_cols, itemsize, max_block_bytes=_MAX_BLOCK_BYTES):
    """Pick a row tile: big enough to amortize per-step overhead, small enough to
    fit double-buffered VMEM, and giving >= 2 grid steps for moderate N (v7x)."""
    if n_rows <= 8:
        return n_rows                                     # full-extent block
    byte_cap = max(8, (max_block_bytes // max(1, n_cols * itemsize)) // 8 * 8)
    half = _round_up(pl.cdiv(n_rows, 2), 8)               # >= 2 steps when possible
    return max(8, min(byte_cap, half, _round_up(n_rows, 8)))


# -----------------------------------------------------------------------------
# Kernels
# -----------------------------------------------------------------------------
def _actnorm_init_kernel(x_ref, w_ref, b_ref, sum_ref, sumsq_ref,
                         *, n_rows, tile_rows, log_init_scale):
    """Tiled reduction over row tiles: per-feature sum / sumsq -> (weight, bias).

    x_ref: (tile_rows, C) tile.  w_ref/b_ref: (1, C) resident outputs.
    sum_ref/sumsq_ref: (1, C) f32 VMEM scratch accumulators.
    """
    step = pl.program_id(0)

    @pl.when(step == 0)
    def _():
        sum_ref[...] = jnp.zeros_like(sum_ref)
        sumsq_ref[...] = jnp.zeros_like(sumsq_ref)

    x = x_ref[...].astype(jnp.float32)                     # (tb, C)
    # Mask rows past the true end of the array (ragged last tile).
    row = jax.lax.broadcasted_iota(jnp.int32, x.shape, 0) + step * tile_rows
    xm = jnp.where(row < n_rows, x, 0.0)
    sum_ref[...] = sum_ref[...] + jnp.sum(xm, axis=0, keepdims=True)
    sumsq_ref[...] = sumsq_ref[...] + jnp.sum(xm * xm, axis=0, keepdims=True)

    @pl.when(step == pl.num_programs(0) - 1)
    def _():
        n = jnp.float32(n_rows)
        mean = sum_ref[...] / n                            # (1, C)
        # torch.var(dim=0) is unbiased (ddof=1).
        var = (sumsq_ref[...] - n * mean * mean) / (n - 1.0)
        var = jnp.maximum(var, jnp.float32(0.2))
        b_ref[...] = -mean
        w_ref[...] = -0.5 * jnp.log(var) + jnp.float32(log_init_scale)


def _actnorm_apply_kernel(x_ref, w_ref, b_ref, y_ref):
    """y = (x + bias) * softplus(weight), (1, C) params broadcast over the row tile."""
    w = w_ref[...].astype(jnp.float32)                     # (1, C)
    b = b_ref[...].astype(jnp.float32)                     # (1, C)
    # Numerically stable softplus, computed once per tile on the (1, C) vector.
    scale = jnp.maximum(w, 0.0) + jnp.log1p(jnp.exp(-jnp.abs(w)))
    x = x_ref[...].astype(jnp.float32)
    y_ref[...] = ((x + b) * scale).astype(y_ref.dtype)


# -----------------------------------------------------------------------------
# Wrappers
# -----------------------------------------------------------------------------
def act_norm_init(x, init_scale=1.0):
    """Compute (weight, bias) from data, mirroring the PyTorch init branch."""
    C = x.shape[-1]
    x2d = x.reshape(-1, C)                                 # free: contiguous
    N = x2d.shape[0]
    assert N > 1, "ActNorm init needs more than one row for unbiased variance."

    tb = _choose_row_tile(N, C, x2d.dtype.itemsize, max_block_bytes=2 << 20)
    grid = (pl.cdiv(N, tb),)

    w, b = pl.pallas_call(
        functools.partial(
            _actnorm_init_kernel,
            n_rows=N,
            tile_rows=tb,
            log_init_scale=float(math.log(init_scale)),
        ),
        out_shape=(
            jax.ShapeDtypeStruct((1, C), jnp.float32),
            jax.ShapeDtypeStruct((1, C), jnp.float32),
        ),
        grid=grid,
        in_specs=[pl.BlockSpec((tb, C), lambda i: (i, 0))],
        out_specs=(
            pl.BlockSpec((1, C), lambda i: (0, 0)),        # resident across reduction
            pl.BlockSpec((1, C), lambda i: (0, 0)),
        ),
        scratch_shapes=[
            pltpu.VMEM((1, C), jnp.float32),               # sum
            pltpu.VMEM((1, C), jnp.float32),               # sumsq
        ],
        compiler_params=pltpu.CompilerParams(
            dimension_semantics=("arbitrary",),
            vmem_limit_bytes=_VMEM_LIMIT_BYTES,
        ),
    )(x2d)
    return w.reshape(C), b.reshape(C)


@jax.jit
def act_norm_apply(x, weight, bias):
    """y = (x + bias) * softplus(weight) with per-last-dim-feature params."""
    C = x.shape[-1]
    orig_shape = x.shape
    x2d = x.reshape(-1, C)                                 # channels-last, free
    N = x2d.shape[0]
    itemsize = x2d.dtype.itemsize

    tb = _choose_row_tile(N, C, itemsize)
    grid = (pl.cdiv(N, tb),)

    cost = pl.CostEstimate(
        flops=2 * N * C,
        transcendentals=2 * C * grid[0],                   # per-tile softplus on (1, C)
        bytes_accessed=2 * N * C * itemsize + 2 * C * 4,
    )

    y = pl.pallas_call(
        _actnorm_apply_kernel,
        out_shape=jax.ShapeDtypeStruct((N, C), x2d.dtype),
        grid=grid,
        in_specs=[
            pl.BlockSpec((tb, C), lambda i: (i, 0)),       # x row tile
            pl.BlockSpec((1, C), lambda i: (0, 0)),        # weight (VMEM-resident)
            pl.BlockSpec((1, C), lambda i: (0, 0)),        # bias   (VMEM-resident)
        ],
        out_specs=pl.BlockSpec((tb, C), lambda i: (i, 0)),
        compiler_params=pltpu.CompilerParams(
            dimension_semantics=("parallel",),
            vmem_limit_bytes=_VMEM_LIMIT_BYTES,
        ),
        cost_estimate=cost,
    )(x2d, weight.reshape(1, C), bias.reshape(1, C))
    return y.reshape(orig_shape)


def act_norm_forward(x, weight, bias, initialized, init_scale=1.0):
    """Full ActNorm.forward semantics (functional: returns updated state)."""
    # The PyTorch module mutates its buffers in place; JAX is functional, so the
    # "initialized" flag and params are threaded through explicitly.
    if not initialized:
        weight, bias = act_norm_init(x, init_scale)
        initialized = True
    y = act_norm_apply(x, weight, bias)
    return y, weight, bias, initialized


# -----------------------------------------------------------------------------
# Demo / correctness check
# -----------------------------------------------------------------------------
def _reference(x, init_scale=1.0):
    """Pure-JAX mirror of the (uninitialized) PyTorch forward."""
    C = x.shape[-1]
    x2 = x.reshape(-1, C).astype(jnp.float32)
    mean = jnp.mean(x2, axis=0)
    var = jnp.var(x2, axis=0, ddof=1)
    var = jnp.maximum(var, 0.2)
    bias = -mean
    weight = -0.5 * jnp.log(var) + math.log(init_scale)
    y = (x.astype(jnp.float32) + bias) * jax.nn.softplus(weight)
    return y.astype(x.dtype), weight, bias


if __name__ == "__main__":
    key = jax.random.PRNGKey(0)

    B, T, C = 4, 8, 128          # batch, seq, num_features (lane-dense C=128)
    INIT_SCALE = 1.0

    x = jax.random.normal(key, (B, T, C), jnp.float32) * 1.7 + 0.3

    # First call: uninitialized -> data-dependent init + transform (both Pallas).
    y, w, b, inited = act_norm_forward(
        x, None, None, initialized=False, init_scale=INIT_SCALE
    )
    y = jax.block_until_ready(y)

    ref_y, ref_w, ref_b = _reference(x, INIT_SCALE)

    assert y.shape == x.shape, y.shape
    assert inited
    assert jnp.allclose(w, ref_w, atol=1e-5, rtol=1e-5), float(
        jnp.max(jnp.abs(w - ref_w))
    )
    assert jnp.allclose(b, ref_b, atol=1e-5, rtol=1e-5), float(
        jnp.max(jnp.abs(b - ref_b))
    )
    assert jnp.allclose(y, ref_y, atol=1e-5, rtol=1e-5), float(
        jnp.max(jnp.abs(y - ref_y))
    )

    # Second call: steady-state path with already-initialized params.
    y2, _, _, _ = act_norm_forward(x, w, b, initialized=True, init_scale=INIT_SCALE)
    y2 = jax.block_until_ready(y2)
    assert jnp.allclose(y2, ref_y, atol=1e-5, rtol=1e-5)

    # bf16 I/O path: inputs/outputs stay bf16 on the wire, compute in f32.
    x_bf16 = x.astype(jnp.bfloat16)
    y_bf16 = jax.block_until_ready(act_norm_apply(x_bf16, w, b))
    assert y_bf16.dtype == jnp.bfloat16
    assert jnp.allclose(
        y_bf16.astype(jnp.float32), ref_y, atol=3e-2, rtol=3e-2
    ), float(jnp.max(jnp.abs(y_bf16.astype(jnp.float32) - ref_y)))

    print("KERNEL_OK")
</pallas_src>

<mosaic_0001>
module attributes {stable_mosaic.version = 11 : i64} {
  func.func @_actnorm_init_kernel(%arg0: i32, %arg1: memref<16x128xf32, #tpu.memory_space<vmem>>, %arg2: memref<1x128xf32, #tpu.memory_space<vmem>>, %arg3: memref<1x128xf32, #tpu.memory_space<vmem>>, %arg4: memref<1x128xf32, #tpu.memory_space<vmem>>, %arg5: memref<1x128xf32, #tpu.memory_space<vmem>>) attributes {dimension_semantics = [#tpu.dimension_semantics<arbitrary>], iteration_bounds = array<i64: 2>, scalar_prefetch = 0 : i64, scratch_operands = 2 : i64, tpu.core_type = #tpu.core_type<tc>, window_params = [{transform_indices = @transform_0, window_bounds = array<i64: 16, 128>}, {pipeline_mode = #tpu.pipeline_mode<synchronous>, transform_indices = @transform_1, window_bounds = array<i64: 1, 128>}, {pipeline_mode = #tpu.pipeline_mode<synchronous>, transform_indices = @transform_2, window_bounds = array<i64: 1, 128>}]} {
    %c0_i32 = arith.constant 0 : i32
    %0 = arith.cmpi eq, %arg0, %c0_i32 : i32
    %1 = arith.extui %0 : i1 to i32
    %c0_i32_0 = arith.constant 0 : i32
    %2 = arith.cmpi ne, %1, %c0_i32_0 : i32
    scf.if %2 {
      %cst_13 = arith.constant 0.000000e+00 : f32
      %26 = vector.broadcast %cst_13 : f32 to vector<1x128xf32>
      %c0_14 = arith.constant 0 : index
      %c0_15 = arith.constant 0 : index
      %27 = vector.load %arg4[%c0_14, %c0_15] : memref<1x128xf32, #tpu.memory_space<vmem>>, vector<1x128xf32>
      tpu.vector_store %arg4[%c0_14, %c0_15], %26 {strides = array<i32>} : memref<1x128xf32, #tpu.memory_space<vmem>>, vector<1x128xf32>,
      %cst_16 = arith.constant 0.000000e+00 : f32
      %28 = vector.broadcast %cst_16 : f32 to vector<1x128xf32>
      %c0_17 = arith.constant 0 : index
      %c0_18 = arith.constant 0 : index
      %29 = vector.load %arg5[%c0_17, %c0_18] : memref<1x128xf32, #tpu.memory_space<vmem>>, vector<1x128xf32>
      tpu.vector_store %arg5[%c0_17, %c0_18], %28 {strides = array<i32>} : memref<1x128xf32, #tpu.memory_space<vmem>>, vector<1x128xf32>,
    } else {
    }
    %c0 = arith.constant 0 : index
    %c0_1 = arith.constant 0 : index
    %3 = vector.load %arg1[%c0, %c0_1] : memref<16x128xf32, #tpu.memory_space<vmem>>, vector<16x128xf32>
    %4 = tpu.iota {dimensions = array<i32: 0>} : vector<16x128xi32>
    %c16_i32 = arith.constant 16 : i32
    %5 = arith.muli %arg0, %c16_i32 : i32
    %6 = vector.broadcast %5 : i32 to vector<16x128xi32>
    %7 = arith.addi %4, %6 : vector<16x128xi32>
    %c32_i32 = arith.constant 32 : i32
    %8 = vector.broadcast %c32_i32 : i32 to vector<16x128xi32>
    %9 = arith.cmpi slt, %7, %8 : vector<16x128xi32>
    %cst = arith.constant 0.000000e+00 : f32
    %10 = vector.broadcast %cst : f32 to vector<16x128xf32>
    %11 = arith.select %9, %3, %10 : vector<16x128xi1>, vector<16x128xf32>
    %c0_2 = arith.constant 0 : index
    %c0_3 = arith.constant 0 : index
    %12 = vector.load %arg4[%c0_2, %c0_3] : memref<1x128xf32, #tpu.memory_space<vmem>>, vector<1x128xf32>
    %cst_4 = arith.constant dense<0.000000e+00> : vector<128xf32>
    %13 = vector.multi_reduction <add>, %11, %cst_4 [0] : vector<16x128xf32> to vector<128xf32>
    %14 = vector.shape_cast %13 : vector<128xf32> to vector<1x128xf32>
    %15 = arith.addf %12, %14 : vector<1x128xf32>
    %c0_5 = arith.constant 0 : index
    %c0_6 = arith.constant 0 : index
    %16 = vector.load %arg4[%c0_5, %c0_6] : memref<1x128xf32, #tpu.memory_space<vmem>>, vector<1x128xf32>
    tpu.vector_store %arg4[%c0_5, %c0_6], %15 {strides = array<i32>} : memref<1x128xf32, #tpu.memory_space<vmem>>, vector<1x128xf32>,
    %c0_7 = arith.constant 0 : index
    %c0_8 = arith.constant 0 : index
    %17 = vector.load %arg5[%c0_7, %c0_8] : memref<1x128xf32, #tpu.memory_space<vmem>>, vector<1x128xf32>
    %18 = arith.mulf %11, %11 : vector<16x128xf32>
    %cst_9 = arith.constant dense<0.000000e+00> : vector<128xf32>
    %19 = vector.multi_reduction <add>, %18, %cst_9 [0] : vector<16x128xf32> to vector<128xf32>
    %20 = vector.shape_cast %19 : vector<128xf32> to vector<1x128xf32>
    %21 = arith.addf %17, %20 : vector<1x128xf32>
    %c0_10 = arith.constant 0 : index
    %c0_11 = arith.constant 0 : index
    %22 = vector.load %arg5[%c0_10, %c0_11] : memref<1x128xf32, #tpu.memory_space<vmem>>, vector<1x128xf32>
    tpu.vector_store %arg5[%c0_10, %c0_11], %21 {strides = array<i32>} : memref<1x128xf32, #tpu.memory_space<vmem>>, vector<1x128xf32>,
    %c1_i32 = arith.constant 1 : i32
    %23 = arith.cmpi eq, %arg0, %c1_i32 : i32
    %24 = arith.extui %23 : i1 to i32
    %c0_i32_12 = arith.constant 0 : i32
    %25 = arith.cmpi ne, %24, %c0_i32_12 : i32
    scf.if %25 {
      %c0_13 = arith.constant 0 : index
      %c0_14 = arith.constant 0 : index
      %26 = vector.load %arg4[%c0_13, %c0_14] : memref<1x128xf32, #tpu.memory_space<vmem>>, vector<1x128xf32>
      %cst_15 = arith.constant 3.200000e+01 : f32
      %27 = vector.broadcast %cst_15 : f32 to vector<1x128xf32>
      %28 = arith.divf %26, %27 : vector<1x128xf32>
      %c0_16 = arith.constant 0 : index
      %c0_17 = arith.constant 0 : index
      %29 = vector.load %arg5[%c0_16, %c0_17] : memref<1x128xf32, #tpu.memory_space<vmem>>, vector<1x128xf32>
      %cst_18 = arith.constant 3.200000e+01 : f32
      %30 = vector.broadcast %cst_18 : f32 to vector<1x128xf32>
      %31 = arith.mulf %30, %28 : vector<1x128xf32>
      %32 = arith.mulf %31, %28 : vector<1x128xf32>
      %33 = arith.subf %29, %32 : vector<1x128xf32>
      %cst_19 = arith.constant 3.200000e+01 : f32
      %cst_20 = arith.constant 1.000000e+00 : f32
      %34 = arith.subf %cst_19, %cst_20 : f32
      %35 = vector.broadcast %34 : f32 to vector<1x128xf32>
      %36 = arith.divf %33, %35 : vector<1x128xf32>
      %cst_21 = arith.constant 2.000000e-01 : f32
      %37 = vector.broadcast %cst_21 : f32 to vector<1x128xf32>
      %38 = arith.maximumf %36, %37 : vector<1x128xf32>
      %cst_22 = arith.constant 0.000000e+00 : f32
      %39 = vector.broadcast %cst_22 : f32 to vector<1x128xf32>
      %40 = arith.subf %39, %28 : vector<1x128xf32>
      %c0_23 = arith.constant 0 : index
      %c0_24 = arith.constant 0 : index
      %41 = vector.load %arg3[%c0_23, %c0_24] : memref<1x128xf32, #tpu.memory_space<vmem>>, vector<1x128xf32>
      tpu.vector_store %arg3[%c0_23, %c0_24], %40 {strides = array<i32>} : memref<1x128xf32, #tpu.memory_space<vmem>>, vector<1x128xf32>,
      %42 = math.log %38 : vector<1x128xf32>
      %cst_25 = arith.constant -5.000000e-01 : f32
      %43 = vector.broadcast %cst_25 : f32 to vector<1x128xf32>
      %44 = arith.mulf %43, %42 : vector<1x128xf32>
      %cst_26 = arith.constant 0.000000e+00 : f32
      %45 = vector.broadcast %cst_26 : f32 to vector<1x128xf32>
      %46 = arith.addf %44, %45 : vector<1x128xf32>
      %c0_27 = arith.constant 0 : index
      %c0_28 = arith.constant 0 : index
      %47 = vector.load %arg2[%c0_27, %c0_28] : memref<1x128xf32, #tpu.memory_space<vmem>>, vector<1x128xf32>
      tpu.vector_store %arg2[%c0_27, %c0_28], %46 {strides = array<i32>} : memref<1x128xf32, #tpu.memory_space<vmem>>, vector<1x128xf32>,
    } else {
    }
    return
  }
  func.func @transform_0(%arg0: i32) -> (i32, i32) {
    %c0_i32 = arith.constant 0 : i32
    %c0_i32_0 = arith.constant 0 : i32
    return %arg0, %c0_i32 : i32, i32
  }
  func.func @transform_1(%arg0: i32) -> (i32, i32) {
    %c0_i32 = arith.constant 0 : i32
    %c0_i32_0 = arith.constant 0 : i32
    %c0_i32_1 = arith.constant 0 : i32
    return %c0_i32, %c0_i32_0 : i32, i32
  }
  func.func @transform_2(%arg0: i32) -> (i32, i32) {
    %c0_i32 = arith.constant 0 : i32
    %c0_i32_0 = arith.constant 0 : i32
    %c0_i32_1 = arith.constant 0 : i32
    return %c0_i32, %c0_i32_0 : i32, i32
  }
}

</mosaic_0001>

<llo_original>
// kernel: tpu_custom_call.1
$region0: #{tpu_custom_call.1}
  #allocation0 [shape = 'u32[]', space=smem, size = 0x4, offset = 0x4, fixed_abs, tag = 'smem constant byte address 0x4 - core index']
  #allocation1 [shape = 'u32[144,128]{1,0:T(1,128)}', space=vmem, size = 0x12000, scoped, tag = 'internal scratch']
  #allocation2 [shape = 'f32[1,128]{1,0:T(1,128)}', space=vmem, size = 0x200, scoped, tag = 'scratch operand']
  #allocation3 [shape = 'f32[1,128]{1,0:T(1,128)}', space=vmem, size = 0x200, scoped, tag = 'scratch operand']
  %s0 = inlined_call_operand.hbm [shape: f32[32,128], index: 0, kind: input, shape index: {}]
  %s1 = inlined_call_operand.hbm [shape: f32[1,128], index: 1, kind: output, shape index: {0}]
  %s2 = inlined_call_operand.hbm [shape: f32[1,128], index: 2, kind: output, shape index: {1}]
  %3 = xla_tuple %s1, %s2
  %s4 = sld [smem:[#allocation0]]
  $region57: #{tpu_custom_call.1} parent=0
    _
  %s6 = ssub.s32 1, %s4
  %s7 = scalar_select 0, %s6, %s4
  $region1: #{tpu_custom_call.1} parent=0
    #allocation4 [shape = 'u8[16384]{0}', space=vmem, size = 0x4000, scoped, tag = 'input window, operand 0']
    #allocation5 [shape = 's32[2]{0}', space=sflag, size = 0x8, scoped, tag = 'scoped memory for tpu_custom_call.1']
    #allocation6 [shape = 's32[2]{0}', space=sflag, size = 0x8, scoped, tag = 'scoped memory for tpu_custom_call.1']
    #allocation7 [shape = 'u8[512]{0}', space=vmem, size = 0x400, scoped, tag = 'output window, operand 0, single buffered']
    #allocation8 [shape = 'u8[512]{0}', space=vmem, size = 0x400, scoped, tag = 'output window, operand 1, single buffered']
    #allocation9 [shape = 's32[1]{0}', space=sflag, size = 0x4, scoped, tag = 'scoped memory for tpu_custom_call.1']
    %8 = vsyncpa [#allocation5], 0
    %s9 = scalar_lea.sflag [#allocation5], 1
    %10 = vsyncpa %s9, 0
    %11 = vsyncpa [#allocation6], 0
    %12 = vsyncpa [#allocation9], 0
    loop: start=0, step=1, limit=4
    $region2: #{tpu_custom_call.1} parent=1 // loop_pre_header
      _
    $region3: #{tpu_custom_call.1} parent=1 // loop_header
      %s14 = sphi 0, %s18
      %p15 = scmp.ge.s32.totalorder %s14, 4
      %s24 = sphi 0, %s26
      %s27 = sphi 0, %s24
      %s28 = sphi 0, %s27
      %s44 = sphi 0, %s28
      %s48 = sphi 0, %s48
      %s50 = sphi 0, %s48
      %s51 = sphi 0, %s50
      %s65 = sphi 0, %s51
      %s69 = sphi 0, %s69
      %s71 = sphi 0, %s69
      %s72 = sphi 0, %s71
      %s86 = sphi 0, %s72
    $region4: #{tpu_custom_call.1} parent=1 // loop_header_branch
      %17 = sbr.rel (%p15) target = $region8
    $region5: #{tpu_custom_call.1} parent=1 // loop_body
      %s19 = ssub.s32 %s14, 1
      %s20 = ssub.s32 %s14, 2
      %s21 = sadd.s32 %s14, 1
      %s22 = ssub.s32 %s14, %s21
      %p23 = scmp.eq.s32.totalorder %s22, 0
      %s25 = sadd.s32 %s24, 1
      %s26 = scalar_select %p23, %s24, %s25
      %p29 = pneg %p23
      %p30 = scmp.eq.s32.totalorder %s14, 1
      %p31 = por %p29, %p30
      %p32 = scmp.ne.s32.totalorder %s24, %s27
      %p33 = scmp.eq.s32.totalorder %s14, 0
      %p34 = por %p32, %p33
      %p35 = scmp.ne.s32.totalorder %s24, %s27
      %p36 = scmp.eq.s32.totalorder %s19, 1
      %p37 = por %p35, %p36
      %p38 = scmp.ne.s32.totalorder %s27, %s28
      %p39 = scmp.eq.s32.totalorder %s19, 0
      %p40 = por %p38, %p39
      %p41 = scmp.ne.s32.totalorder %s27, %s28
      %p42 = scmp.eq.s32.totalorder %s20, 1
      %p43 = por %p41, %p42
      %p45 = scmp.ne.s32.totalorder %s28, %s44
      %p46 = scmp.eq.s32.totalorder %s20, 0
      %p47 = por %p45, %p46
      %s49 = sadd.s32 %s48, 1
      %p52 = scmp.eq.s32.totalorder %s14, 1
      %p53 = scmp.ne.s32.totalorder %s48, %s50
      %p54 = scmp.eq.s32.totalorder %s14, 0
      %p55 = por %p53, %p54
      %p56 = scmp.ne.s32.totalorder %s48, %s50
      %p57 = scmp.eq.s32.totalorder %s19, 1
      %p58 = por %p56, %p57
      %p59 = scmp.ne.s32.totalorder %s50, %s51
      %p60 = scmp.eq.s32.totalorder %s19, 0
      %p61 = por %p59, %p60
      %p62 = scmp.ne.s32.totalorder %s50, %s51
      %p63 = scmp.eq.s32.totalorder %s20, 1
      %p64 = por %p62, %p63
      %p66 = scmp.ne.s32.totalorder %s51, %s65
      %p67 = scmp.eq.s32.totalorder %s20, 0
      %p68 = por %p66, %p67
      %s70 = sadd.s32 %s69, 1
      %p73 = scmp.eq.s32.totalorder %s14, 1
      %p74 = scmp.ne.s32.totalorder %s69, %s71
      %p75 = scmp.eq.s32.totalorder %s14, 0
      %p76 = por %p74, %p75
      %p77 = scmp.ne.s32.totalorder %s69, %s71
      %p78 = scmp.eq.s32.totalorder %s19, 1
      %p79 = por %p77, %p78
      %p80 = scmp.ne.s32.totalorder %s71, %s72
      %p81 = scmp.eq.s32.totalorder %s19, 0
      %p82 = por %p80, %p81
      %p83 = scmp.ne.s32.totalorder %s71, %s72
      %p84 = scmp.eq.s32.totalorder %s20, 1
      %p85 = por %p83, %p84
      %p87 = scmp.ne.s32.totalorder %s72, %s86
      %p88 = scmp.eq.s32.totalorder %s20, 0
      %p89 = por %p87, %p88
      %p90 = scmp.le.s32.totalorder 1, %s14
      %p91 = scmp.lt.s32.totalorder %s14, 3
      %p92 = pnand %p90, %p91
      %p93 = pneg %p92
      // Predicated region
      $region9: #{tpu_custom_call.1} parent=5 // pred_check
        _
      $region10: #{tpu_custom_call.1} parent=5 // pred_check_branch
        %95 = sbr.rel (%p92) target = $region12
      $region11: #{tpu_custom_call.1} parent=5 // pred_region
        %s96 = ssub.s32 %s14, 1
      $region12: #{tpu_custom_call.1} parent=5 // pred_fallthru
        _
      %p97 = scmp.lt.s32.totalorder %s14, 2
      // Predicated region
      $region13: #{tpu_custom_call.1} parent=5 // pred_check
        %p98 = pneg %p97
      $region14: #{tpu_custom_call.1} parent=5 // pred_check_branch
        %100 = sbr.rel (%p98) target = $region16
      $region15: #{tpu_custom_call.1} parent=5 // pred_region
        // Predicated region
        $region17: #{tpu_custom_call.1} parent=15 // pred_check
          %p101 = pneg %p34
        $region18: #{tpu_custom_call.1} parent=15 // pred_check_branch
          %103 = sbr.rel (%p101) target = $region20
        $region19: #{tpu_custom_call.1} parent=15 // pred_region
          %s104 = sand.u32 %s24, 1
          %s105 = scalar_lea.sflag [#allocation5], %s104
          %s106 = sand.u32 %s24, 1
          %s107 = smul.addr %s106, 16
          %s108 = scalar_lea.vmem [#allocation4], %s107
          %s109 = smul.u32 2, %s14
          %s111 = ssub.s32 256, 256
          %112 = vsyncadd %s105, %s111
          %s113 = smul.addr %s109, 128
          %s114 = scalar_lea.hbm %s0, %s113
          %s115 = sshll.u32 %s108, 4
          %s116 = int_to_ptr.vmem [resolvable:$true] %s115
          %121 = dma.hbm_to_vmem [thread:$0]  %s114, 256, %s116, %s105, 128, 128, 8
        $region20: #{tpu_custom_call.1} parent=15 // pred_fallthru
          _
      $region16: #{tpu_custom_call.1} parent=5 // pred_fallthru
        _
      %p122 = scmp.le.s32.totalorder 1, %s14
      %p123 = scmp.lt.s32.totalorder %s14, 3
      %p124 = pnand %p122, %p123
      %p125 = pneg %p124
      // Predicated region
      $region21: #{tpu_custom_call.1} parent=5 // pred_check
        _
      $region22: #{tpu_custom_call.1} parent=5 // pred_check_branch
        %127 = sbr.rel (%p124) target = $region24
      $region23: #{tpu_custom_call.1} parent=5 // pred_region
        %s128 = ssub.s32 %s14, 1
        %s129 = sand.u32 %s27, 1
        %s130 = scalar_lea.sflag [#allocation5], %s129
        %s131 = sand.u32 %s27, 1
        %s132 = smul.addr %s131, 16
        %s133 = scalar_lea.vmem [#allocation4], %s132
        // Predicated region
        $region25: #{tpu_custom_call.1} parent=23 // pred_check
          %p134 = pneg %p40
        $region26: #{tpu_custom_call.1} parent=23 // pred_check_branch
          %136 = sbr.rel (%p134) target = $region28
        $region27: #{tpu_custom_call.1} parent=23 // pred_region
          %137 = dma.done %s130, 256
        $region28: #{tpu_custom_call.1} parent=23 // pred_fallthru
          _
        %s138 = sand.u32 %s27, 1
        %s139 = scalar_lea.sflag [#allocation5], %s138
        %s140 = sand.u32 %s27, 1
        %s141 = smul.addr %s140, 16
        %s142 = scalar_lea.vmem [#allocation4], %s141
        %p143 = pneg %p40
        %p144 = pneg %p37
        %p145 = pneg %p61
        %p146 = pneg %p58
        %p147 = pneg %p82
        %p148 = pneg %p79
        %s149 = smul.u32 2, %s19
        %p150 = scmp.eq.s32.totalorder %s19, 0
        // Predicated region
        $region29: #{tpu_custom_call.1} parent=23 // pred_check
          %p151 = pneg %p150
        $region30: #{tpu_custom_call.1} parent=23 // pred_check_branch
          %153 = sbr.rel (%p151) target = $region32
        $region31: #{tpu_custom_call.1} parent=23 // pred_region
          %154 = vst [vmem:[#allocation2] sm:$0x1] 0.0
          %155 = vst [vmem:[#allocation3] sm:$0x1] 0.0
        $region32: #{tpu_custom_call.1} parent=23 // pred_fallthru
          _
        %v156 = vld [vmem:[%s133] sm:$0xff]
        %v157 = vld [vmem:[%s133 + $0x8] sm:$0xff]
        %v158 = vlaneseq
        %v159 = vshrl.u32 %v158, 7
        %v160 = vadd.s32 %v159, 8
        %s161 = smul.u32 %s19, 16
        %v162 = vstv %s161
        %v163 = vadd.s32 %v159, %v162
        %v164 = vadd.s32 %v160, %v162
        %vm165 = vcmp.lt.s32.totalorder %v163, 32
        %vm166 = vcmp.lt.s32.totalorder %v164, 32
        %v167 = vsel %vm165, %v156, 0.0
        %v168 = vsel %vm166, %v157, 0.0
        %v169 = vld [vmem:[#allocation2] sm:$0x1]
        %v170 = vadd.f32 %v167, %v168
        %v171 = vrot.slane %v170, 4
        %v172 = vadd.f32 %v170, %v171
        %v173 = vrot.slane %v172, 2
        %v174 = vadd.f32 %v172, %v173
        %v175 = vrot.slane %v174, 1
        %v176 = vadd.f32 %v174, %v175
        %v177 = vadd.f32 %v169, %v176
        %178 = vst [vmem:[#allocation2] sm:$0x1] %v177
        %v179 = vld [vmem:[#allocation3] sm:$0x1]
        %v180 = vmul.f32 %v167, %v167
        %v181 = vmul.f32 %v168, %v168
        %v182 = vadd.f32 %v180, %v181
        %v183 = vrot.slane %v182, 4
        %v184 = vadd.f32 %v182, %v183
        %v185 = vrot.slane %v184, 2
        %v186 = vadd.f32 %v184, %v185
        %v187 = vrot.slane %v186, 1
        %v188 = vadd.f32 %v186, %v187
        %v189 = vadd.f32 %v179, %v188
        %190 = vst [vmem:[#allocation3] sm:$0x1] %v189
        %p191 = scmp.eq.s32.totalorder %s19, 1
        // Predicated region
        $region33: #{tpu_custom_call.1} parent=23 // pred_check
          %p192 = pneg %p191
        $region34: #{tpu_custom_call.1} parent=23 // pred_check_branch
          %194 = sbr.rel (%p192) target = $region36
        $region35: #{tpu_custom_call.1} parent=23 // pred_region
          %v195 = vld [vmem:[#allocation2] sm:$0x1]
          %v196 = vrcp.pop 32.0
          %v197 = vmul.f32 %v195, %v196
          %v198 = vld [vmem:[#allocation3] sm:$0x1]
          %v199 = vmul.f32 %v197, 32.0
          %v200 = vmul.f32 %v199, %v197
          %v201 = vsub.f32 %v198, %v200
          %v202 = vrcp.pop 31.0
          %v203 = vmul.f32 %v201, %v202
          %v204 = vmax.f32 %v203, 0.2
          %v205 = vsub.f32 0.0, %v197
          %206 = vst [vmem:[#allocation8] sm:$0x1] %v205
          %v207 = vlog2.pop %v204
          %v208 = vmul.f32 %v207, 0.6931472
          %v209 = vmul.f32 %v208, -0.5
          %v210 = vadd.f32 %v209, 0.0
          %211 = vst [vmem:[#allocation7] sm:$0x1] %v210
        $region36: #{tpu_custom_call.1} parent=23 // pred_fallthru
          _
        // Predicated region
        $region37: #{tpu_custom_call.1} parent=23 // pred_check
          %p212 = pneg %p58
        $region38: #{tpu_custom_call.1} parent=23 // pred_check_branch
          %214 = sbr.rel (%p212) target = $region40
        $region39: #{tpu_custom_call.1} parent=23 // pred_region
          %s216 = ssub.s32 16, 16
          %217 = vsyncadd [#allocation6], %s216
          %s219 = sshll.u32 [#allocation7], 4
          %s220 = int_to_ptr.vmem [resolvable:$true] %s219
          %222 = dma.vmem_to_hbm [thread:$0]  %s220, 16, %s1, [#allocation6]
        $region40: #{tpu_custom_call.1} parent=23 // pred_fallthru
          _
        // Predicated region
        $region41: #{tpu_custom_call.1} parent=23 // pred_check
          %p223 = pneg %p79
        $region42: #{tpu_custom_call.1} parent=23 // pred_check_branch
          %225 = sbr.rel (%p223) target = $region44
        $region43: #{tpu_custom_call.1} parent=23 // pred_region
          %s227 = ssub.s32 16, 16
          %228 = vsyncadd [#allocation9], %s227
          %s230 = sshll.u32 [#allocation8], 4
          %s231 = int_to_ptr.vmem [resolvable:$true] %s230
          %233 = dma.vmem_to_hbm [thread:$0]  %s231, 16, %s2, [#allocation9]
        $region44: #{tpu_custom_call.1} parent=23 // pred_fallthru
          _
        // Predicated region
        $region45: #{tpu_custom_call.1} parent=23 // pred_check
          %p234 = pneg %p58
        $region46: #{tpu_custom_call.1} parent=23 // pred_check_branch
          %236 = sbr.rel (%p234) target = $region48
        $region47: #{tpu_custom_call.1} parent=23 // pred_region
          %237 = dma.done [#allocation6], 16
        $region48: #{tpu_custom_call.1} parent=23 // pred_fallthru
          _
        // Predicated region
        $region49: #{tpu_custom_call.1} parent=23 // pred_check
          %p238 = pneg %p79
        $region50: #{tpu_custom_call.1} parent=23 // pred_check_branch
          %240 = sbr.rel (%p238) target = $region52
        $region51: #{tpu_custom_call.1} parent=23 // pred_region
          %241 = dma.done [#allocation9], 16
        $region52: #{tpu_custom_call.1} parent=23 // pred_fallthru
          _
      $region24: #{tpu_custom_call.1} parent=5 // pred_fallthru
        _
      %p242 = scmp.le.s32.totalorder 2, %s14
      // Predicated region
      $region53: #{tpu_custom_call.1} parent=5 // pred_check
        %p243 = pneg %p242
      $region54: #{tpu_custom_call.1} parent=5 // pred_check_branch
        %245 = sbr.rel (%p243) target = $region56
      $region55: #{tpu_custom_call.1} parent=5 // pred_region
        %s246 = ssub.s32 %s14, 2
      $region56: #{tpu_custom_call.1} parent=5 // pred_fallthru
        _
    $region6: #{tpu_custom_call.1} parent=1 // loop_footer
      %s18 = sadd.s32 1, %s14
    $region7: #{tpu_custom_call.1} parent=1 // loop_footer_branch
      %13 = sbr.rel target = $region3
    $region8: #{tpu_custom_call.1} parent=1 // loop_exit
      _
    %247 = vsyncpa [#allocation5], 1
    %s248 = scalar_lea.sflag [#allocation5], 1
    %249 = vsyncpa %s248, 1
    %250 = vsyncpa [#allocation6], 1
    %s251 = scalar_lea.sflag [#allocation6], 1
    %252 = vsyncpa %s251, 1
    %253 = vsyncpa [#allocation9], 1

</llo_original>
